<compile_context>
chip_gen: v7x
topology: tpu7x:2x2x1
jax: 0.10.0
libtpu: 0.0.40
codegen_flags: <defaults>
</compile_context>

<pallas_src>
import functools

import jax
import jax.numpy as jnp
from jax.experimental import pallas as pl
from jax.experimental.pallas import tpu as pltpu


def _round_up(x, m):
    return ((x + m - 1) // m) * m


def _vmem_budget_bytes():
    """~75% of physical per-TC VMEM (96 MiB on v5e/v6e, 48 MiB on v7x)."""
    try:
        cap = int(pltpu.get_tpu_info().vmem_capacity_bytes)
    except Exception:
        cap = 64 * 1024 * 1024          # conservative fallback (v7x physical)
    cap = max(cap, 32 * 1024 * 1024)
    return (cap * 3) // 4


# ---------------------------------------------------------------------------
# Kernels
# ---------------------------------------------------------------------------

def _gate(x_ref, o_ref, nw_ref, eps):
    """RMSNorm + swish (SiLU) gate in fp32."""
    x = x_ref[...].astype(jnp.float32)
    o = o_ref[...].astype(jnp.float32)
    nw = nw_ref[...].astype(jnp.float32)            # (1, N), broadcasts
    var = jnp.mean(x * x, axis=-1, keepdims=True)
    rstd = jax.lax.rsqrt(var + eps)
    y = (x * rstd) * nw
    return y * o * jax.nn.sigmoid(o)


def _resident_kernel(x_ref, o_ref, nw_ref, w_ref, *rest, eps, has_bias):
    # 1-D grid over row tiles.  The whole [N, D_pad] weight is VMEM-resident
    # (single copy, fetched from HBM exactly once) -> no inner D_out axis.
    if has_bias:
        lb_ref, out_ref = rest
    else:
        (out_ref,) = rest

    y = _gate(x_ref, o_ref, nw_ref, eps).astype(w_ref.dtype)
    out = jnp.dot(y, w_ref[...], preferred_element_type=jnp.float32)
    if has_bias:
        out = out + lb_ref[...].astype(jnp.float32)
    out_ref[...] = out.astype(out_ref.dtype)


def _strip_kernel(x_ref, o_ref, nw_ref, w_ref, *rest, eps, has_bias):
    # 2-D grid: i = row tile ("parallel"), j = D_out strip (innermost,
    # "arbitrary").  y is computed once per row tile (j == 0) into a VMEM
    # scratch and reused for every weight strip.  Correctness of this caching
    # RELIES on j being the innermost sequential axis -- do not reorder the
    # grid or mark j "parallel".
    if has_bias:
        lb_ref, out_ref, y_ref = rest
    else:
        out_ref, y_ref = rest

    j = pl.program_id(1)

    @pl.when(j == 0)
    def _():
        y_ref[...] = _gate(x_ref, o_ref, nw_ref, eps).astype(y_ref.dtype)

    # Plain (m, k) x (k, n) MXU dot; weight was pre-transposed to [N, D_out]
    # in the wrapper, so no in-kernel XLU transpose competes with vmatmul.
    out = jnp.dot(y_ref[...], w_ref[...], preferred_element_type=jnp.float32)
    if has_bias:
        out = out + lb_ref[...].astype(jnp.float32)
    out_ref[...] = out.astype(out_ref.dtype)


# ---------------------------------------------------------------------------
# Dispatch paths
# ---------------------------------------------------------------------------

def _run_resident(x2, o2, nw, w_t, lb, *, eps, tm, d_pad, budget, out_dtype):
    M, N = x2.shape
    D_out = w_t.shape[1]
    has_bias = lb is not None

    M_pad = _round_up(M, tm)
    if M_pad != M:
        pad = M_pad - M
        x2 = jnp.pad(x2, ((0, pad), (0, 0)))
        o2 = jnp.pad(o2, ((0, pad), (0, 0)))
    if d_pad != D_out:
        w_t = jnp.pad(w_t, ((0, 0), (0, d_pad - D_out)))
        if has_bias:
            lb = jnp.pad(lb, ((0, 0), (0, d_pad - D_out)))

    args = [x2, o2, nw, w_t]
    in_specs = [
        pl.BlockSpec((tm, N), lambda i: (i, 0)),                   # x rows
        pl.BlockSpec((tm, N), lambda i: (i, 0)),                   # o rows
        pl.BlockSpec(memory_space=pltpu.MemorySpace.VMEM),         # norm weight
        pl.BlockSpec(memory_space=pltpu.MemorySpace.VMEM),         # full weight
    ]
    if has_bias:
        args.append(lb)
        in_specs.append(pl.BlockSpec(memory_space=pltpu.MemorySpace.VMEM))

    kernel = functools.partial(_resident_kernel, eps=eps, has_bias=has_bias)
    out = pl.pallas_call(
        kernel,
        out_shape=jax.ShapeDtypeStruct((M_pad, d_pad), out_dtype),
        grid_spec=pltpu.PrefetchScalarGridSpec(
            num_scalar_prefetch=0,
            grid=(M_pad // tm,),
            in_specs=in_specs,
            out_specs=pl.BlockSpec((tm, d_pad), lambda i: (i, 0)),
        ),
        compiler_params=pltpu.CompilerParams(
            dimension_semantics=("parallel",),
            vmem_limit_bytes=budget),
    )(*args)
    return out[:M, :D_out]


def _run_strip(x2, o2, nw, w_t, lb, *, eps, tm, tn, budget, out_dtype):
    M, N = x2.shape
    D_out = w_t.shape[1]
    has_bias = lb is not None
    itm = jnp.dtype(out_dtype).itemsize

    tn = min(_round_up(tn, 128), _round_up(D_out, 128))

    def foot(t_m, t_n):
        return (2 * t_m * N * itm * 2      # x, o (double-buffered)
                + 2 * N * t_n * itm        # weight strips (double-buffered)
                + t_m * N * itm            # y scratch
                + 2 * t_m * t_n * itm      # out (double-buffered)
                + 4 * N + 4 * t_n)         # norm weight / bias

    # Shrink tn first (keeps arithmetic intensity, which is set by tm), then tm.
    while foot(tm, tn) > budget and tn > 128:
        tn = max(128, _round_up(tn // 2, 128))
    while foot(tm, tn) > budget and tm > 64:
        tm = max(64, _round_up(tm // 2, 16))

    M_pad = _round_up(M, tm)
    D_pad = _round_up(D_out, tn)
    if M_pad != M:
        pad = M_pad - M
        x2 = jnp.pad(x2, ((0, pad), (0, 0)))
        o2 = jnp.pad(o2, ((0, pad), (0, 0)))
    if D_pad != D_out:
        w_t = jnp.pad(w_t, ((0, 0), (0, D_pad - D_out)))
        if has_bias:
            lb = jnp.pad(lb, ((0, 0), (0, D_pad - D_out)))

    args = [x2, o2, nw, w_t]
    in_specs = [
        pl.BlockSpec((tm, N), lambda i, j: (i, 0)),                # x rows
        pl.BlockSpec((tm, N), lambda i, j: (i, 0)),                # o rows
        pl.BlockSpec(memory_space=pltpu.MemorySpace.VMEM),         # norm weight
        pl.BlockSpec((N, tn), lambda i, j: (0, j)),                # weight strip
    ]
    if has_bias:
        args.append(lb)
        in_specs.append(pl.BlockSpec((1, tn), lambda i, j: (0, j)))

    kernel = functools.partial(_strip_kernel, eps=eps, has_bias=has_bias)
    out = pl.pallas_call(
        kernel,
        out_shape=jax.ShapeDtypeStruct((M_pad, D_pad), out_dtype),
        grid_spec=pltpu.PrefetchScalarGridSpec(
            num_scalar_prefetch=0,
            grid=(M_pad // tm, D_pad // tn),
            in_specs=in_specs,
            out_specs=pl.BlockSpec((tm, tn), lambda i, j: (i, j)),
            scratch_shapes=[pltpu.VMEM((tm, N), out_dtype)],       # cached y
        ),
        compiler_params=pltpu.CompilerParams(
            # j (D_out strips) MUST stay innermost & "arbitrary": the y scratch
            # written at j == 0 is reused by later j steps of the same row tile.
            dimension_semantics=("parallel", "arbitrary"),
            vmem_limit_bytes=budget),
    )(*args)
    return out[:M, :D_out]


# ---------------------------------------------------------------------------
# Public wrapper
# ---------------------------------------------------------------------------

def fused_rmsnorm_swish_gate_linear(x, o, norm_weight, linear_weight,
                                    linear_bias=None, *, eps=1e-5,
                                    tm=None, tn=512, resident=None):
    """x, o: [..., N]; norm_weight: [N]; linear_weight: [D_out, N];
    linear_bias: [D_out] or None.  Returns [..., D_out] in x.dtype."""
    orig_lead = x.shape[:-1]
    N = x.shape[-1]
    D_out = linear_weight.shape[0]
    out_dtype = x.dtype
    has_bias = linear_bias is not None

    x2 = x.reshape(-1, N)
    o2 = o.reshape(-1, N)
    M = x2.shape[0]

    if M == 0:                                  # zero-size grid edge case
        return jnp.zeros((*orig_lead, D_out), dtype=out_dtype)

    itm = jnp.dtype(out_dtype).itemsize
    budget = _vmem_budget_bytes()

    # Match torch: linear weight / bias are cast to y.dtype (== x.dtype) before
    # the projection (gives the bf16 MXU path + half the weight traffic for
    # bf16 inputs).  Pre-transpose once to [N, D_out] for a plain MXU dot.
    w_t = jnp.transpose(linear_weight.astype(out_dtype))           # (N, D_out)
    lb = (linear_bias.astype(out_dtype).reshape(1, D_out)
          if has_bias else None)
    nw = norm_weight.reshape(1, N)

    def row_tile(req):
        t = min(_round_up(req, 16), _round_up(M, 16))
        # Ensure >= 2 row tiles when there is enough work so both v7x
        # TensorCores get row tiles (no effect on single-TC v5e/v6e).
        if M > 16 and _round_up(M, t) // t < 2:
            t = _round_up((M + 1) // 2, 16)
        return t

    # ----------------------- resident-weight fast path ----------------------
    d_pad = _round_up(D_out, 128)               # lane-dense unmasked stores
    w_bytes = N * d_pad * itm

    def resident_tiles_bytes(t):
        return (2 * t * N * itm * 2             # x, o (double-buffered)
                + 2 * t * d_pad * itm           # out (double-buffered)
                + 4 * N + 4 * d_pad)            # norm weight + bias

    tm_res = row_tile(tm if tm is not None else 256)
    while w_bytes + resident_tiles_bytes(tm_res) > budget and tm_res > 16:
        tm_res = max(16, _round_up(tm_res // 2, 16))
    if resident is None:
        resident = (w_bytes + resident_tiles_bytes(tm_res)) <= budget

    if resident:
        try:
            out = _run_resident(x2, o2, nw, w_t, lb, eps=eps, tm=tm_res,
                                d_pad=d_pad, budget=budget, out_dtype=out_dtype)
            return out.reshape(*orig_lead, D_out)
        except Exception:
            # Safety net: fall back to the streaming path on any compile issue.
            pass

    # --------------------------- strip-mined path ---------------------------
    tm_strip = row_tile(tm if tm is not None else 768)
    out = _run_strip(x2, o2, nw, w_t, lb, eps=eps, tm=tm_strip, tn=tn,
                     budget=budget, out_dtype=out_dtype)
    return out.reshape(*orig_lead, D_out)


# ---------------------------------------------------------------------------
# Reference + self-test
# ---------------------------------------------------------------------------

def _reference(x, o, norm_weight, linear_weight, linear_bias, eps):
    xf = x.astype(jnp.float32)
    of = o.astype(jnp.float32)
    var = jnp.mean(xf * xf, axis=-1, keepdims=True)
    rstd = jax.lax.rsqrt(var + eps)
    y = xf * rstd * norm_weight.astype(jnp.float32)
    y = y * of * jax.nn.sigmoid(of)
    y = y.astype(x.dtype)
    out = jnp.einsum("...i,oi->...o", y.astype(jnp.float32),
                     linear_weight.astype(jnp.float32))
    if linear_bias is not None:
        out = out + linear_bias.astype(jnp.float32)
    return out.astype(x.dtype)


if __name__ == "__main__":
    # Small shapes: batch=2, seq=8, hidden=32, out_features=64.
    B, T, N, D_out = 2, 8, 32, 64
    eps = 1e-5

    key = jax.random.PRNGKey(0)
    kx, ko, kw, kb = jax.random.split(key, 4)

    x = jax.random.normal(kx, (B, T, N), dtype=jnp.float32)
    o = jax.random.normal(ko, (B, T, N), dtype=jnp.float32)

    # Module __init__: norm weight = ones(hidden_size); linear weight/bias are
    # forward args -> deterministic synthetic init here.
    norm_weight = jnp.ones((N,), dtype=jnp.float32)
    linear_weight = 0.02 * jax.random.normal(kw, (D_out, N), dtype=jnp.float32)
    linear_bias = 0.01 * jax.random.normal(kb, (D_out,), dtype=jnp.float32)

    ref = _reference(x, o, norm_weight, linear_weight, linear_bias, eps)

    # Resident-weight fast path (auto-selected for these sizes).
    out = jax.block_until_ready(fused_rmsnorm_swish_gate_linear(
        x, o, norm_weight, linear_weight, linear_bias, eps=eps))
    assert out.shape == (B, T, D_out), out.shape
    assert jnp.allclose(out, ref, atol=1e-4, rtol=1e-4), \
        float(jnp.max(jnp.abs(out - ref)))

    # Strip-mined fallback path (forced) must agree too.
    out_s = jax.block_until_ready(fused_rmsnorm_swish_gate_linear(
        x, o, norm_weight, linear_weight, linear_bias, eps=eps, resident=False))
    assert jnp.allclose(out_s, ref, atol=1e-4, rtol=1e-4), \
        float(jnp.max(jnp.abs(out_s - ref)))

    # Bias-less variant (separate static kernel path).
    ref_nb = _reference(x, o, norm_weight, linear_weight, None, eps)
    out_nb = jax.block_until_ready(fused_rmsnorm_swish_gate_linear(
        x, o, norm_weight, linear_weight, None, eps=eps))
    assert jnp.allclose(out_nb, ref_nb, atol=1e-4, rtol=1e-4), \
        float(jnp.max(jnp.abs(out_nb - ref_nb)))

    print("KERNEL_OK")
</pallas_src>

<mosaic_0001>
module attributes {stable_mosaic.version = 11 : i64} {
  func.func @_resident_kernel(%arg0: i32, %arg1: memref<16x32xf32, #tpu.memory_space<vmem>>, %arg2: memref<16x32xf32, #tpu.memory_space<vmem>>, %arg3: memref<1x32xf32, #tpu.memory_space<vmem>>, %arg4: memref<32x128xf32, #tpu.memory_space<vmem>>, %arg5: memref<1x128xf32, #tpu.memory_space<vmem>>, %arg6: memref<16x128xf32, #tpu.memory_space<vmem>>) attributes {dimension_semantics = [#tpu.dimension_semantics<parallel>], iteration_bounds = array<i64: 1>, scalar_prefetch = 0 : i64, scratch_operands = 0 : i64, tpu.core_type = #tpu.core_type<tc>, window_params = [{transform_indices = @transform_0, window_bounds = array<i64: 16, 32>}, {transform_indices = @transform_1, window_bounds = array<i64: 16, 32>}, {pipeline_mode = #tpu.pipeline_mode<synchronous>, transform_indices = @transform_2, window_bounds = array<i64: 1, 32>}, {pipeline_mode = #tpu.pipeline_mode<synchronous>, transform_indices = @transform_3, window_bounds = array<i64: 32, 128>}, {pipeline_mode = #tpu.pipeline_mode<synchronous>, transform_indices = @transform_4, window_bounds = array<i64: 1, 128>}, {transform_indices = @transform_5, window_bounds = array<i64: 16, 128>}]} {
    %c0 = arith.constant 0 : index
    %c0_0 = arith.constant 0 : index
    %0 = vector.load %arg1[%c0, %c0_0] : memref<16x32xf32, #tpu.memory_space<vmem>>, vector<16x32xf32>
    %c0_1 = arith.constant 0 : index
    %c0_2 = arith.constant 0 : index
    %1 = vector.load %arg2[%c0_1, %c0_2] : memref<16x32xf32, #tpu.memory_space<vmem>>, vector<16x32xf32>
    %c0_3 = arith.constant 0 : index
    %c0_4 = arith.constant 0 : index
    %2 = vector.load %arg3[%c0_3, %c0_4] : memref<1x32xf32, #tpu.memory_space<vmem>>, vector<1x32xf32>
    %3 = arith.mulf %0, %0 : vector<16x32xf32>
    %cst = arith.constant dense<0.000000e+00> : vector<16xf32>
    %4 = vector.multi_reduction <add>, %3, %cst [1] : vector<16x32xf32> to vector<16xf32>
    %5 = vector.shape_cast %4 : vector<16xf32> to vector<16x1xf32>
    %cst_5 = arith.constant 3.200000e+01 : f32
    %6 = vector.broadcast %cst_5 : f32 to vector<16x1xf32>
    %7 = arith.divf %5, %6 : vector<16x1xf32>
    %cst_6 = arith.constant 9.99999974E-6 : f32
    %8 = vector.broadcast %cst_6 : f32 to vector<16x1xf32>
    %9 = arith.addf %7, %8 : vector<16x1xf32>
    %10 = math.rsqrt %9 : vector<16x1xf32>
    %11 = vector.broadcast %10 : vector<16x1xf32> to vector<16x32xf32>
    %12 = arith.mulf %0, %11 : vector<16x32xf32>
    %13 = vector.broadcast %2 : vector<1x32xf32> to vector<16x32xf32>
    %14 = arith.mulf %12, %13 : vector<16x32xf32>
    %15 = arith.mulf %14, %1 : vector<16x32xf32>
    %16 = arith.negf %1 : vector<16x32xf32>
    %17 = math.exp %16 : vector<16x32xf32>
    %cst_7 = arith.constant 1.000000e+00 : f32
    %18 = vector.broadcast %cst_7 : f32 to vector<16x32xf32>
    %19 = arith.addf %18, %17 : vector<16x32xf32>
    %20 = arith.divf %18, %19 : vector<16x32xf32>
    %21 = arith.mulf %15, %20 : vector<16x32xf32>
    %c0_8 = arith.constant 0 : index
    %c0_9 = arith.constant 0 : index
    %22 = vector.load %arg4[%c0_8, %c0_9] : memref<32x128xf32, #tpu.memory_space<vmem>>, vector<32x128xf32>
    %cst_10 = arith.constant dense<0.000000e+00> : vector<16x128xf32>
    %23 = tpu.matmul %21, %22, %cst_10 {dimension_numbers = #tpu.dot_dimension_numbers<[1], [0], [0], [1], [0, 0, 1, 1], [], []>} : vector<16x32xf32>, vector<32x128xf32>, vector<16x128xf32> -> vector<16x128xf32>
    %c0_11 = arith.constant 0 : index
    %c0_12 = arith.constant 0 : index
    %24 = vector.load %arg5[%c0_11, %c0_12] : memref<1x128xf32, #tpu.memory_space<vmem>>, vector<1x128xf32>
    %25 = vector.broadcast %24 : vector<1x128xf32> to vector<16x128xf32>
    %26 = arith.addf %23, %25 : vector<16x128xf32>
    %c0_13 = arith.constant 0 : index
    %c0_14 = arith.constant 0 : index
    %27 = vector.load %arg6[%c0_13, %c0_14] : memref<16x128xf32, #tpu.memory_space<vmem>>, vector<16x128xf32>
    tpu.vector_store %arg6[%c0_13, %c0_14], %26 {strides = array<i32>} : memref<16x128xf32, #tpu.memory_space<vmem>>, vector<16x128xf32>,
    return
  }
  func.func @transform_0(%arg0: i32) -> (i32, i32) {
    %c0_i32 = arith.constant 0 : i32
    %c0_i32_0 = arith.constant 0 : i32
    return %arg0, %c0_i32 : i32, i32
  }
  func.func @transform_1(%arg0: i32) -> (i32, i32) {
    %c0_i32 = arith.constant 0 : i32
    %c0_i32_0 = arith.constant 0 : i32
    return %arg0, %c0_i32 : i32, i32
  }
  func.func @transform_2(%arg0: i32) -> (i32, i32) {
    %c0_i32 = arith.constant 0 : i32
    %c0_i32_0 = arith.constant 0 : i32
    %c0_i32_1 = arith.constant 0 : i32
    return %c0_i32, %c0_i32_0 : i32, i32
  }
  func.func @transform_3(%arg0: i32) -> (i32, i32) {
    %c0_i32 = arith.constant 0 : i32
    %c0_i32_0 = arith.constant 0 : i32
    %c0_i32_1 = arith.constant 0 : i32
    return %c0_i32, %c0_i32_0 : i32, i32
  }
  func.func @transform_4(%arg0: i32) -> (i32, i32) {
    %c0_i32 = arith.constant 0 : i32
    %c0_i32_0 = arith.constant 0 : i32
    %c0_i32_1 = arith.constant 0 : i32
    return %c0_i32, %c0_i32_0 : i32, i32
  }
  func.func @transform_5(%arg0: i32) -> (i32, i32) {
    %c0_i32 = arith.constant 0 : i32
    %c0_i32_0 = arith.constant 0 : i32
    return %arg0, %c0_i32 : i32, i32
  }
}

module attributes {stable_mosaic.version = 11 : i64} {
  func.func @_strip_kernel(%arg0: i32, %arg1: i32, %arg2: memref<16x32xf32, #tpu.memory_space<vmem>>, %arg3: memref<16x32xf32, #tpu.memory_space<vmem>>, %arg4: memref<1x32xf32, #tpu.memory_space<vmem>>, %arg5: memref<32x128xf32, #tpu.memory_space<vmem>>, %arg6: memref<1x128xf32, #tpu.memory_space<vmem>>, %arg7: memref<16x128xf32, #tpu.memory_space<vmem>>, %arg8: memref<16x32xf32, #tpu.memory_space<vmem>>) attributes {dimension_semantics = [#tpu.dimension_semantics<parallel>, #tpu.dimension_semantics<arbitrary>], iteration_bounds = array<i64: 1, 1>, scalar_prefetch = 0 : i64, scratch_operands = 1 : i64, tpu.core_type = #tpu.core_type<tc>, window_params = [{transform_indices = @transform_0, window_bounds = array<i64: 16, 32>}, {transform_indices = @transform_1, window_bounds = array<i64: 16, 32>}, {pipeline_mode = #tpu.pipeline_mode<synchronous>, transform_indices = @transform_2, window_bounds = array<i64: 1, 32>}, {transform_indices = @transform_3, window_bounds = array<i64: 32, 128>}, {transform_indices = @transform_4, window_bounds = array<i64: 1, 128>}, {transform_indices = @transform_5, window_bounds = array<i64: 16, 128>}]} {
    %c0_i32 = arith.constant 0 : i32
    %0 = arith.cmpi eq, %arg1, %c0_i32 : i32
    %1 = arith.extui %0 : i1 to i32
    %c0_i32_0 = arith.constant 0 : i32
    %2 = arith.cmpi ne, %1, %c0_i32_0 : i32
    scf.if %2 {
      %c0_8 = arith.constant 0 : index
      %c0_9 = arith.constant 0 : index
      %10 = vector.load %arg2[%c0_8, %c0_9] : memref<16x32xf32, #tpu.memory_space<vmem>>, vector<16x32xf32>
      %c0_10 = arith.constant 0 : index
      %c0_11 = arith.constant 0 : index
      %11 = vector.load %arg3[%c0_10, %c0_11] : memref<16x32xf32, #tpu.memory_space<vmem>>, vector<16x32xf32>
      %c0_12 = arith.constant 0 : index
      %c0_13 = arith.constant 0 : index
      %12 = vector.load %arg4[%c0_12, %c0_13] : memref<1x32xf32, #tpu.memory_space<vmem>>, vector<1x32xf32>
      %13 = arith.mulf %10, %10 : vector<16x32xf32>
      %cst_14 = arith.constant dense<0.000000e+00> : vector<16xf32>
      %14 = vector.multi_reduction <add>, %13, %cst_14 [1] : vector<16x32xf32> to vector<16xf32>
      %15 = vector.shape_cast %14 : vector<16xf32> to vector<16x1xf32>
      %cst_15 = arith.constant 3.200000e+01 : f32
      %16 = vector.broadcast %cst_15 : f32 to vector<16x1xf32>
      %17 = arith.divf %15, %16 : vector<16x1xf32>
      %cst_16 = arith.constant 9.99999974E-6 : f32
      %18 = vector.broadcast %cst_16 : f32 to vector<16x1xf32>
      %19 = arith.addf %17, %18 : vector<16x1xf32>
      %20 = math.rsqrt %19 : vector<16x1xf32>
      %21 = vector.broadcast %20 : vector<16x1xf32> to vector<16x32xf32>
      %22 = arith.mulf %10, %21 : vector<16x32xf32>
      %23 = vector.broadcast %12 : vector<1x32xf32> to vector<16x32xf32>
      %24 = arith.mulf %22, %23 : vector<16x32xf32>
      %25 = arith.mulf %24, %11 : vector<16x32xf32>
      %26 = arith.negf %11 : vector<16x32xf32>
      %27 = math.exp %26 : vector<16x32xf32>
      %cst_17 = arith.constant 1.000000e+00 : f32
      %28 = vector.broadcast %cst_17 : f32 to vector<16x32xf32>
      %29 = arith.addf %28, %27 : vector<16x32xf32>
      %30 = arith.divf %28, %29 : vector<16x32xf32>
      %31 = arith.mulf %25, %30 : vector<16x32xf32>
      %c0_18 = arith.constant 0 : index
      %c0_19 = arith.constant 0 : index
      %32 = vector.load %arg8[%c0_18, %c0_19] : memref<16x32xf32, #tpu.memory_space<vmem>>, vector<16x32xf32>
      tpu.vector_store %arg8[%c0_18, %c0_19], %31 {strides = array<i32>} : memref<16x32xf32, #tpu.memory_space<vmem>>, vector<16x32xf32>,
    } else {
    }
    %c0 = arith.constant 0 : index
    %c0_1 = arith.constant 0 : index
    %3 = vector.load %arg8[%c0, %c0_1] : memref<16x32xf32, #tpu.memory_space<vmem>>, vector<16x32xf32>
    %c0_2 = arith.constant 0 : index
    %c0_3 = arith.constant 0 : index
    %4 = vector.load %arg5[%c0_2, %c0_3] : memref<32x128xf32, #tpu.memory_space<vmem>>, vector<32x128xf32>
    %cst = arith.constant dense<0.000000e+00> : vector<16x128xf32>
    %5 = tpu.matmul %3, %4, %cst {dimension_numbers = #tpu.dot_dimension_numbers<[1], [0], [0], [1], [0, 0, 1, 1], [], []>} : vector<16x32xf32>, vector<32x128xf32>, vector<16x128xf32> -> vector<16x128xf32>
    %c0_4 = arith.constant 0 : index
    %c0_5 = arith.constant 0 : index
    %6 = vector.load %arg6[%c0_4, %c0_5] : memref<1x128xf32, #tpu.memory_space<vmem>>, vector<1x128xf32>
    %7 = vector.broadcast %6 : vector<1x128xf32> to vector<16x128xf32>
    %8 = arith.addf %5, %7 : vector<16x128xf32>
    %c0_6 = arith.constant 0 : index
    %c0_7 = arith.constant 0 : index
    %9 = vector.load %arg7[%c0_6, %c0_7] : memref<16x128xf32, #tpu.memory_space<vmem>>, vector<16x128xf32>
    tpu.vector_store %arg7[%c0_6, %c0_7], %8 {strides = array<i32>} : memref<16x128xf32, #tpu.memory_space<vmem>>, vector<16x128xf32>,
    return
  }
  func.func @transform_0(%arg0: i32, %arg1: i32) -> (i32, i32) {
    %c0_i32 = arith.constant 0 : i32
    %c0_i32_0 = arith.constant 0 : i32
    return %arg0, %c0_i32 : i32, i32
  }
  func.func @transform_1(%arg0: i32, %arg1: i32) -> (i32, i32) {
    %c0_i32 = arith.constant 0 : i32
    %c0_i32_0 = arith.constant 0 : i32
    return %arg0, %c0_i32 : i32, i32
  }
  func.func @transform_2(%arg0: i32, %arg1: i32) -> (i32, i32) {
    %c0_i32 = arith.constant 0 : i32
    %c0_i32_0 = arith.constant 0 : i32
    %c0_i32_1 = arith.constant 0 : i32
    return %c0_i32, %c0_i32_0 : i32, i32
  }
  func.func @transform_3(%arg0: i32, %arg1: i32) -> (i32, i32) {
    %c0_i32 = arith.constant 0 : i32
    %c0_i32_0 = arith.constant 0 : i32
    return %c0_i32, %arg1 : i32, i32
  }
  func.func @transform_4(%arg0: i32, %arg1: i32) -> (i32, i32) {
    %c0_i32 = arith.constant 0 : i32
    %c0_i32_0 = arith.constant 0 : i32
    return %c0_i32, %arg1 : i32, i32
  }
  func.func @transform_5(%arg0: i32, %arg1: i32) -> (i32, i32) {
    %c0_i32 = arith.constant 0 : i32
    return %arg0, %arg1 : i32, i32
  }
}

</mosaic_0001>

<llo_original>
// kernel: tpu_custom_call.1
$region0: #{tpu_custom_call.1}
  #allocation0 [shape = 'u32[]', space=smem, size = 0x4, offset = 0x4, fixed_abs, tag = 'smem constant byte address 0x4 - core index']
  #allocation1 [shape = 'u32[144,128]{1,0:T(1,128)}', space=vmem, size = 0x12000, scoped, tag = 'internal scratch']
  %s0 = inlined_call_operand.hbm [shape: f32[16,32], index: 0, kind: input, shape index: {}]
  %s1 = inlined_call_operand.hbm [shape: f32[16,32], index: 1, kind: input, shape index: {}]
  %s2 = inlined_call_operand.vmem [shape: f32[1,32], index: 2, kind: input, shape index: {}]
  %s3 = inlined_call_operand.hbm [shape: f32[32,128], index: 3, kind: input, shape index: {}]
  %s4 = inlined_call_operand.vmem [shape: f32[1,128], index: 4, kind: input, shape index: {}]
  %s5 = inlined_call_operand.hbm [shape: f32[16,128], index: 5, kind: output, shape index: {}]
  %s6 = sld [smem:[#allocation0]]
  $region42: #{tpu_custom_call.1} parent=0
    _
  %s8 = ssub.s32 1, %s6
  %s9 = scalar_select 0, %s8, %s6
  $region1: #{tpu_custom_call.1} parent=0
    #allocation2 [shape = 'u8[8192]{0}', space=vmem, size = 0x2000, scoped, tag = 'input window, operand 0, single buffered']
    #allocation3 [shape = 's32[1]{0}', space=sflag, size = 0x4, scoped, tag = 'scoped memory for tpu_custom_call.1']
    #allocation4 [shape = 's32[1]{0}', space=sflag, size = 0x4, scoped, tag = 'scoped memory for tpu_custom_call.1']
    #allocation5 [shape = 'u8[8192]{0}', space=vmem, size = 0x2000, scoped, tag = 'input window, operand 1, single buffered']
    #allocation6 [shape = 's32[1]{0}', space=sflag, size = 0x4, scoped, tag = 'scoped memory for tpu_custom_call.1']
    #allocation7 [shape = 'u8[16384]{0}', space=vmem, size = 0x4000, scoped, tag = 'input window, operand 3, single buffered']
    #allocation8 [shape = 'u8[8192]{0}', space=vmem, size = 0x2000, scoped, tag = 'output window, operand 0, single buffered']
    %10 = vsyncpa [#allocation3], 0
    %11 = vsyncpa [#allocation6], 0
    %12 = vsyncpa [#allocation4], 0
    // Predicated region
    $region2: #{tpu_custom_call.1} parent=1 // pred_check
      _
    $region3: #{tpu_custom_call.1} parent=1 // pred_check_branch
      %14 = sbr.rel (0) target = $region5
    $region4: #{tpu_custom_call.1} parent=1 // pred_region
      %s16 = ssub.s32 256, 256
      %17 = vsyncadd [#allocation3], %s16
      %s18 = sshll.u32 [#allocation2], 4
      %s19 = int_to_ptr.vmem [resolvable:$true] %s18
      %24 = dma.hbm_to_vmem [thread:$0]  %s0, 256, %s19, [#allocation3], 128, 128, 8
    $region5: #{tpu_custom_call.1} parent=1 // pred_fallthru
      _
    // Predicated region
    $region6: #{tpu_custom_call.1} parent=1 // pred_check
      _
    $region7: #{tpu_custom_call.1} parent=1 // pred_check_branch
      %26 = sbr.rel (0) target = $region9
    $region8: #{tpu_custom_call.1} parent=1 // pred_region
      %s28 = ssub.s32 256, 256
      %29 = vsyncadd [#allocation6], %s28
      %s30 = sshll.u32 [#allocation5], 4
      %s31 = int_to_ptr.vmem [resolvable:$true] %s30
      %36 = dma.hbm_to_vmem [thread:$0]  %s1, 256, %s31, [#allocation6], 128, 128, 8
    $region9: #{tpu_custom_call.1} parent=1 // pred_fallthru
      _
    // Predicated region
    $region10: #{tpu_custom_call.1} parent=1 // pred_check
      _
    $region11: #{tpu_custom_call.1} parent=1 // pred_check_branch
      %38 = sbr.rel (0) target = $region13
    $region12: #{tpu_custom_call.1} parent=1 // pred_region
      _
    $region13: #{tpu_custom_call.1} parent=1 // pred_fallthru
      _
    // Predicated region
    $region14: #{tpu_custom_call.1} parent=1 // pred_check
      _
    $region15: #{tpu_custom_call.1} parent=1 // pred_check_branch
      %40 = sbr.rel (0) target = $region17
    $region16: #{tpu_custom_call.1} parent=1 // pred_region
      %s42 = ssub.s32 512, 512
      %43 = vsyncadd [#allocation6], %s42
      %s44 = sshll.u32 [#allocation7], 4
      %s45 = int_to_ptr.vmem [resolvable:$true] %s44
      %50 = dma.hbm_to_vmem [thread:$0]  %s3, 512, %s45, [#allocation6], 128, 128, 8
    $region17: #{tpu_custom_call.1} parent=1 // pred_fallthru
      _
    // Predicated region
    $region18: #{tpu_custom_call.1} parent=1 // pred_check
      _
    $region19: #{tpu_custom_call.1} parent=1 // pred_check_branch
      %52 = sbr.rel (0) target = $region21
    $region20: #{tpu_custom_call.1} parent=1 // pred_region
      _
    $region21: #{tpu_custom_call.1} parent=1 // pred_fallthru
      _
    // Predicated region
    $region22: #{tpu_custom_call.1} parent=1 // pred_check
      _
    $region23: #{tpu_custom_call.1} parent=1 // pred_check_branch
      %54 = sbr.rel (0) target = $region25
    $region24: #{tpu_custom_call.1} parent=1 // pred_region
      %55 = dma.done [#allocation3], 256
    $region25: #{tpu_custom_call.1} parent=1 // pred_fallthru
      _
    // Predicated region
    $region26: #{tpu_custom_call.1} parent=1 // pred_check
      _
    $region27: #{tpu_custom_call.1} parent=1 // pred_check_branch
      %57 = sbr.rel (0) target = $region29
    $region28: #{tpu_custom_call.1} parent=1 // pred_region
      %58 = dma.done [#allocation6], 256
    $region29: #{tpu_custom_call.1} parent=1 // pred_fallthru
      _
    // Predicated region
    $region30: #{tpu_custom_call.1} parent=1 // pred_check
      _
    $region31: #{tpu_custom_call.1} parent=1 // pred_check_branch
      %60 = sbr.rel (0) target = $region33
    $region32: #{tpu_custom_call.1} parent=1 // pred_region
      %61 = dma.done [#allocation6], 512
    $region33: #{tpu_custom_call.1} parent=1 // pred_fallthru
      _
    %v62 = vld [vmem:[#allocation2] sm:$0xff]
    %v63 = vld [vmem:[#allocation2 + $0x8] sm:$0xff]
    %v64 = vld [vmem:[#allocation5] sm:$0xff]
    %v65 = vld [vmem:[#allocation5 + $0x8] sm:$0xff]
    %v66 = vld [vmem:[%s2] sm:$0x1]
    %v67 = vmul.f32 %v62, %v62
    %v68 = vmul.f32 %v63, %v63
    %vm69 = vcmask 261120
    %v70 = vsel %vm69, %v67, 0.0
    %71 = vadd.xlane.f32.xlu0 %v70
    %v72 = vpop.xlane.xlu0 %71
    %v73 = vsel %vm69, %v68, 0.0
    %74 = vadd.xlane.f32.xlu0 %v73
    %v75 = vpop.xlane.xlu0 %74
    %v76 = vrcp.pop 32.0
    %v77 = vmul.f32 %v72, %v76
    %v78 = vmul.f32 %v75, %v76
    %v79 = vadd.f32 %v77, 1e-05
    %v80 = vadd.f32 %v78, 1e-05
    %v81 = vrsqrt.pop %v79
    %v82 = vrsqrt.pop %v80
    %v83 = vmul.f32 %v62, %v81
    %v84 = vmul.f32 %v63, %v82
    %v86 = vlaneseq
    %v87 = vshrl.u32 %v86, 7
    %v88 = vsub.s32 0, %v87
    %v89 = vrot.slane %v66, %v88
    %v91 = vmul.f32 %v83, %v89
    %v92 = vmul.f32 %v84, %v89
    %v93 = vmul.f32 %v91, %v64
    %v94 = vmul.f32 %v92, %v65
    %v95 = vxor.u32 %v64, 2147483648
    %v96 = vxor.u32 %v65, 2147483648
    %v97 = vmul.f32 %v95, 1.442695
    %v98 = vpow.pop %v97
    %v99 = vmul.f32 %v96, 1.442695
    %v100 = vpow.pop %v99
    %v101 = vadd.f32 %v98, 1.0
    %v102 = vadd.f32 %v100, 1.0
    %v103 = vrcp.pop %v101
    %v104 = vmul.f32 1.0, %v103
    %v105 = vrcp.pop %v102
    %v106 = vmul.f32 1.0, %v105
    %v107 = vmul.f32 %v93, %v104
    %v108 = vmul.f32 %v94, %v106
    %v109 = vld [vmem:[#allocation7] sm:$0xff]
    %v110 = vld [vmem:[#allocation7 + $0x8] sm:$0xff]
    %v111 = vld [vmem:[#allocation7 + $0x10] sm:$0xff]
    %v112 = vld [vmem:[#allocation7 + $0x18] sm:$0xff]
    %v113 = vld [vmem:[%s4] sm:$0x1]
    %v115 = vlaneseq
    %v116 = vshrl.u32 %v115, 7
    %v117 = vsub.s32 0, %v116
    %v118 = vrot.slane %v113, %v117
    %v121 = vsel %vm69, %v107, 0
    %v124 = vsel %vm69, %v108, 0
    %126 = vmatprep.subr.mxu0 0.0
    %127 = vmatpush1.msra.mxu0 %v109
    %128 = vmatprep.subr.mxu0 0.0
    %129 = vmatpush1.msra.mxu0 %v110
    %130 = vmatprep.subr.mxu0 0.0
    %131 = vmatpush1.msra.mxu0 %v111
    %132 = vmatprep.subr.mxu0 0.0
    %133 = vmatpush1.msra.mxu0 %v112
    %134 = vmatprep.subr.mxu0 0.0
    %135 = vmatpush1.msra.mxu0 0.0
    %136 = vmatprep.subr.mxu0 0.0
    %137 = vmatpush1.msra.mxu0 0.0
    %138 = vmatprep.subr.mxu0 0.0
    %139 = vmatpush1.msra.mxu0 0.0
    %140 = vmatprep.subr.mxu0 0.0
    %141 = vmatpush1.msra.mxu0 0.0
    %142 = vmatprep.subr.mxu0 0.0
    %143 = vmatpush1.msra.mxu0 0.0
    %144 = vmatprep.subr.mxu0 0.0
    %145 = vmatpush1.msra.mxu0 0.0
    %146 = vmatprep.subr.mxu0 0.0
    %147 = vmatpush1.msra.mxu0 0.0
    %148 = vmatprep.subr.mxu0 0.0
    %149 = vmatpush1.msra.mxu0 0.0
    %150 = vmatprep.subr.mxu0 0.0
    %151 = vmatpush1.msra.mxu0 0.0
    %152 = vmatprep.subr.mxu0 0.0
    %153 = vmatpush1.msra.mxu0 0.0
    %154 = vmatprep.subr.mxu0 0.0
    %155 = vmatpush1.msra.mxu0 0.0
    %156 = vmatprep.subr.mxu0 0.0
    %157 = vmatpush1.msra.mxu0 0.0
    %158 = vmatprep.subr.mxu0 0.0
    %159 = vmatpush1.msra.mxu0 0.0
    %160 = vmatprep.subr.mxu0 0.0
    %161 = vmatpush1.msra.mxu0 0.0
    %162 = vmatprep.subr.mxu0 0.0
    %163 = vmatpush1.msra.mxu0 0.0
    %164 = vmatprep.subr.mxu0 0.0
    %165 = vmatpush1.msra.mxu0 0.0
    %166 = vmatprep.subr.mxu0 0.0
    %167 = vmatpush1.msra.mxu0 0.0
    %168 = vmatprep.subr.mxu0 0.0
    %169 = vmatpush1.msra.mxu0 0.0
    %170 = vmatprep.subr.mxu0 0.0
    %171 = vmatpush1.msra.mxu0 0.0
    %172 = vmatprep.subr.mxu0 0.0
    %173 = vmatpush1.msra.mxu0 0.0
    %174 = vmatprep.subr.mxu0 0.0
    %175 = vmatpush1.msra.mxu0 0.0
    %176 = vmatprep.subr.mxu0 0.0
    %177 = vmatpush1.msra.mxu0 0.0
    %178 = vmatprep.subr.mxu0 0.0
    %179 = vmatpush1.msra.mxu0 0.0
    %180 = vmatprep.subr.mxu0 0.0
    %181 = vmatpush1.msra.mxu0 0.0
    %182 = vmatprep.subr.mxu0 0.0
    %183 = vmatpush1.msra.mxu0 0.0
    %184 = vmatprep.subr.mxu0 0.0
    %185 = vmatpush1.msra.mxu0 0.0
    %186 = vmatprep.subr.mxu0 0.0
    %187 = vmatpush1.msra.mxu0 0.0
    %188 = vmatprep.subr.mxu0 0.0
    %189 = vmatpush1.msra.mxu0 0.0
    %190 = vmatprep.mubr.f32.mxu0 0.0
    %191 = vmatmul.mubr.f32.gmra.mrb[0].mxu0 %v121
    %v192 = vpop.f32.mrb[0].mxu0
    %v193 = vadd.f32 %v118, %v192
    %v194 = vpop.f32.mrb[0].mxu0
    %195 = vmatprep.mubr.f32.mxu0 0.0
    %196 = vmatmul.mubr.f32.gmra.mrb[0].mxu0 %v124
    %v197 = vpop.f32.mrb[0].mxu0
    %v198 = vadd.f32 %v118, %v197
    %v199 = vpop.f32.mrb[0].mxu0
    %200 = vdwg.mxu0
    %201 = vst [vmem:[#allocation8] sm:$0xff] %v193
    %202 = vst [vmem:[#allocation8 + $0x8] sm:$0xff] %v198
    // Predicated region
    $region34: #{tpu_custom_call.1} parent=1 // pred_check
      _
    $region35: #{tpu_custom_call.1} parent=1 // pred_check_branch
      %204 = sbr.rel (0) target = $region37
    $region36: #{tpu_custom_call.1} parent=1 // pred_region
      %s206 = ssub.s32 256, 256
      %207 = vsyncadd [#allocation4], %s206
      %s208 = sshll.u32 [#allocation8], 4
      %s209 = int_to_ptr.vmem [resolvable:$true] %s208
      %214 = dma.vmem_to_hbm [thread:$0]  %s209, 256, %s5, [#allocation4], 128, 128, 8
    $region37: #{tpu_custom_call.1} parent=1 // pred_fallthru
      _
    // Predicated region
    $region38: #{tpu_custom_call.1} parent=1 // pred_check
      _
    $region39: #{tpu_custom_call.1} parent=1 // pred_check_branch
      %216 = sbr.rel (0) target = $region41
    $region40: #{tpu_custom_call.1} parent=1 // pred_region
      %217 = dma.done [#allocation4], 256
    $region41: #{tpu_custom_call.1} parent=1 // pred_fallthru
      _
    %218 = vsyncpa [#allocation3], 1
    %219 = vsyncpa [#allocation6], 1
    %220 = vsyncpa [#allocation4], 1

// kernel: tpu_custom_call.1
$region0: #{tpu_custom_call.1}
  #allocation0 [shape = 'u32[]', space=smem, size = 0x4, offset = 0x4, fixed_abs, tag = 'smem constant byte address 0x4 - core index']
  #allocation1 [shape = 'u32[144,128]{1,0:T(1,128)}', space=vmem, size = 0x12000, scoped, tag = 'internal scratch']
  #allocation2 [shape = 'f32[16,32]{1,0:T(8,128)}', space=vmem, size = 0x2000, scoped, tag = 'scratch operand']
  %s0 = inlined_call_operand.hbm [shape: f32[16,32], index: 0, kind: input, shape index: {}]
  %s1 = inlined_call_operand.hbm [shape: f32[16,32], index: 1, kind: input, shape index: {}]
  %s2 = inlined_call_operand.vmem [shape: f32[1,32], index: 2, kind: input, shape index: {}]
  %s3 = inlined_call_operand.hbm [shape: f32[32,128], index: 3, kind: input, shape index: {}]
  %s4 = inlined_call_operand.vmem [shape: f32[1,128], index: 4, kind: input, shape index: {}]
  %s5 = inlined_call_operand.hbm [shape: f32[16,128], index: 5, kind: output, shape index: {}]
  %s6 = sld [smem:[#allocation0]]
  $region46: #{tpu_custom_call.1} parent=0
    _
  %s8 = ssub.s32 1, %s6
  %s9 = scalar_select 0, %s8, %s6
  $region1: #{tpu_custom_call.1} parent=0
    #allocation3 [shape = 'u8[8192]{0}', space=vmem, size = 0x2000, scoped, tag = 'input window, operand 0, single buffered']
    #allocation4 [shape = 's32[1]{0}', space=sflag, size = 0x4, scoped, tag = 'scoped memory for tpu_custom_call.1']
    #allocation5 [shape = 's32[1]{0}', space=sflag, size = 0x4, scoped, tag = 'scoped memory for tpu_custom_call.1']
    #allocation6 [shape = 'u8[8192]{0}', space=vmem, size = 0x2000, scoped, tag = 'input window, operand 1, single buffered']
    #allocation7 [shape = 's32[1]{0}', space=sflag, size = 0x4, scoped, tag = 'scoped memory for tpu_custom_call.1']
    #allocation8 [shape = 'u8[16384]{0}', space=vmem, size = 0x4000, scoped, tag = 'input window, operand 3, single buffered']
    #allocation9 [shape = 'u8[8192]{0}', space=vmem, size = 0x2000, scoped, tag = 'output window, operand 0, single buffered']
    %10 = vsyncpa [#allocation4], 0
    %11 = vsyncpa [#allocation7], 0
    %12 = vsyncpa [#allocation5], 0
    // Predicated region
    $region2: #{tpu_custom_call.1} parent=1 // pred_check
      _
    $region3: #{tpu_custom_call.1} parent=1 // pred_check_branch
      %14 = sbr.rel (0) target = $region5
    $region4: #{tpu_custom_call.1} parent=1 // pred_region
      %s16 = ssub.s32 256, 256
      %17 = vsyncadd [#allocation4], %s16
      %s18 = sshll.u32 [#allocation3], 4
      %s19 = int_to_ptr.vmem [resolvable:$true] %s18
      %24 = dma.hbm_to_vmem [thread:$0]  %s0, 256, %s19, [#allocation4], 128, 128, 8
    $region5: #{tpu_custom_call.1} parent=1 // pred_fallthru
      _
    // Predicated region
    $region6: #{tpu_custom_call.1} parent=1 // pred_check
      _
    $region7: #{tpu_custom_call.1} parent=1 // pred_check_branch
      %26 = sbr.rel (0) target = $region9
    $region8: #{tpu_custom_call.1} parent=1 // pred_region
      %s28 = ssub.s32 256, 256
      %29 = vsyncadd [#allocation7], %s28
      %s30 = sshll.u32 [#allocation6], 4
      %s31 = int_to_ptr.vmem [resolvable:$true] %s30
      %36 = dma.hbm_to_vmem [thread:$0]  %s1, 256, %s31, [#allocation7], 128, 128, 8
    $region9: #{tpu_custom_call.1} parent=1 // pred_fallthru
      _
    // Predicated region
    $region10: #{tpu_custom_call.1} parent=1 // pred_check
      _
    $region11: #{tpu_custom_call.1} parent=1 // pred_check_branch
      %38 = sbr.rel (0) target = $region13
    $region12: #{tpu_custom_call.1} parent=1 // pred_region
      _
    $region13: #{tpu_custom_call.1} parent=1 // pred_fallthru
      _
    // Predicated region
    $region14: #{tpu_custom_call.1} parent=1 // pred_check
      _
    $region15: #{tpu_custom_call.1} parent=1 // pred_check_branch
      %40 = sbr.rel (0) target = $region17
    $region16: #{tpu_custom_call.1} parent=1 // pred_region
      %s42 = ssub.s32 512, 512
      %43 = vsyncadd [#allocation7], %s42
      %s44 = sshll.u32 [#allocation8], 4
      %s45 = int_to_ptr.vmem [resolvable:$true] %s44
      %50 = dma.hbm_to_vmem [thread:$0]  %s3, 512, %s45, [#allocation7], 128, 128, 8
    $region17: #{tpu_custom_call.1} parent=1 // pred_fallthru
      _
    // Predicated region
    $region18: #{tpu_custom_call.1} parent=1 // pred_check
      _
    $region19: #{tpu_custom_call.1} parent=1 // pred_check_branch
      %52 = sbr.rel (0) target = $region21
    $region20: #{tpu_custom_call.1} parent=1 // pred_region
      _
    $region21: #{tpu_custom_call.1} parent=1 // pred_fallthru
      _
    // Predicated region
    $region22: #{tpu_custom_call.1} parent=1 // pred_check
      _
    $region23: #{tpu_custom_call.1} parent=1 // pred_check_branch
      %54 = sbr.rel (0) target = $region25
    $region24: #{tpu_custom_call.1} parent=1 // pred_region
      %55 = dma.done [#allocation4], 256
    $region25: #{tpu_custom_call.1} parent=1 // pred_fallthru
      _
    // Predicated region
    $region26: #{tpu_custom_call.1} parent=1 // pred_check
      _
    $region27: #{tpu_custom_call.1} parent=1 // pred_check_branch
      %57 = sbr.rel (0) target = $region29
    $region28: #{tpu_custom_call.1} parent=1 // pred_region
      %58 = dma.done [#allocation7], 256
    $region29: #{tpu_custom_call.1} parent=1 // pred_fallthru
      _
    // Predicated region
    $region30: #{tpu_custom_call.1} parent=1 // pred_check
      _
    $region31: #{tpu_custom_call.1} parent=1 // pred_check_branch
      %60 = sbr.rel (0) target = $region33
    $region32: #{tpu_custom_call.1} parent=1 // pred_region
      %61 = dma.done [#allocation7], 512
    $region33: #{tpu_custom_call.1} parent=1 // pred_fallthru
      _
    %p62 = scmp.eq.s32.totalorder 0, 0
    // Predicated region
    $region34: #{tpu_custom_call.1} parent=1 // pred_check
      %p63 = pneg %p62
    $region35: #{tpu_custom_call.1} parent=1 // pred_check_branch
      %65 = sbr.rel (%p63) target = $region37
    $region36: #{tpu_custom_call.1} parent=1 // pred_region
      %v66 = vld [vmem:[#allocation3] sm:$0xff]
      %v67 = vld [vmem:[#allocation3 + $0x8] sm:$0xff]
      %v68 = vld [vmem:[#allocation6] sm:$0xff]
      %v69 = vld [vmem:[#allocation6 + $0x8] sm:$0xff]
      %v70 = vld [vmem:[%s2] sm:$0x1]
      %v71 = vmul.f32 %v66, %v66
      %v72 = vmul.f32 %v67, %v67
      %vm73 = vcmask 261120
      %v74 = vsel %vm73, %v71, 0.0
      %75 = vadd.xlane.f32.xlu0 %v74
      %v76 = vpop.xlane.xlu0 %75
      %v77 = vsel %vm73, %v72, 0.0
      %78 = vadd.xlane.f32.xlu0 %v77
      %v79 = vpop.xlane.xlu0 %78
      %v80 = vrcp.pop 32.0
      %v81 = vmul.f32 %v76, %v80
      %v82 = vmul.f32 %v79, %v80
      %v83 = vadd.f32 %v81, 1e-05
      %v84 = vadd.f32 %v82, 1e-05
      %v85 = vrsqrt.pop %v83
      %v86 = vrsqrt.pop %v84
      %v87 = vmul.f32 %v66, %v85
      %v88 = vmul.f32 %v67, %v86
      %v90 = vlaneseq
      %v91 = vshrl.u32 %v90, 7
      %v92 = vsub.s32 0, %v91
      %v93 = vrot.slane %v70, %v92
      %v95 = vmul.f32 %v87, %v93
      %v96 = vmul.f32 %v88, %v93
      %v97 = vmul.f32 %v95, %v68
      %v98 = vmul.f32 %v96, %v69
      %v99 = vxor.u32 %v68, 2147483648
      %v100 = vxor.u32 %v69, 2147483648
      %v101 = vmul.f32 %v99, 1.442695
      %v102 = vpow.pop %v101
      %v103 = vmul.f32 %v100, 1.442695
      %v104 = vpow.pop %v103
      %v105 = vadd.f32 %v102, 1.0
      %v106 = vadd.f32 %v104, 1.0
      %v107 = vrcp.pop %v105
      %v108 = vmul.f32 1.0, %v107
      %v109 = vrcp.pop %v106
      %v110 = vmul.f32 1.0, %v109
      %v111 = vmul.f32 %v97, %v108
      %v112 = vmul.f32 %v98, %v110
      %113 = vst.msk [vmem:[#allocation2] sm:$0xff] %vm73, %v111
      %114 = vst.msk [vmem:[#allocation2 + $0x8] sm:$0xff] %vm73, %v112
    $region37: #{tpu_custom_call.1} parent=1 // pred_fallthru
      _
    %v115 = vld [vmem:[#allocation2] sm:$0xff]
    %v116 = vld [vmem:[#allocation2 + $0x8] sm:$0xff]
    %v117 = vld [vmem:[#allocation8] sm:$0xff]
    %v118 = vld [vmem:[#allocation8 + $0x8] sm:$0xff]
    %v119 = vld [vmem:[#allocation8 + $0x10] sm:$0xff]
    %v120 = vld [vmem:[#allocation8 + $0x18] sm:$0xff]
    %v121 = vld [vmem:[%s4] sm:$0x1]
    %v123 = vlaneseq
    %v124 = vshrl.u32 %v123, 7
    %v125 = vsub.s32 0, %v124
    %v126 = vrot.slane %v121, %v125
    %vm128 = vcmask 261120
    %v130 = vsel %vm128, %v115, 0
    %v133 = vsel %vm128, %v116, 0
    %135 = vmatprep.subr.mxu0 0.0
    %136 = vmatpush1.msra.mxu0 %v117
    %137 = vmatprep.subr.mxu0 0.0
    %138 = vmatpush1.msra.mxu0 %v118
    %139 = vmatprep.subr.mxu0 0.0
    %140 = vmatpush1.msra.mxu0 %v119
    %141 = vmatprep.subr.mxu0 0.0
    %142 = vmatpush1.msra.mxu0 %v120
    %143 = vmatprep.subr.mxu0 0.0
    %144 = vmatpush1.msra.mxu0 0.0
    %145 = vmatprep.subr.mxu0 0.0
    %146 = vmatpush1.msra.mxu0 0.0
    %147 = vmatprep.subr.mxu0 0.0
    %148 = vmatpush1.msra.mxu0 0.0
    %149 = vmatprep.subr.mxu0 0.0
    %150 = vmatpush1.msra.mxu0 0.0
    %151 = vmatprep.subr.mxu0 0.0
    %152 = vmatpush1.msra.mxu0 0.0
    %153 = vmatprep.subr.mxu0 0.0
    %154 = vmatpush1.msra.mxu0 0.0
    %155 = vmatprep.subr.mxu0 0.0
    %156 = vmatpush1.msra.mxu0 0.0
    %157 = vmatprep.subr.mxu0 0.0
    %158 = vmatpush1.msra.mxu0 0.0
    %159 = vmatprep.subr.mxu0 0.0
    %160 = vmatpush1.msra.mxu0 0.0
    %161 = vmatprep.subr.mxu0 0.0
    %162 = vmatpush1.msra.mxu0 0.0
    %163 = vmatprep.subr.mxu0 0.0
    %164 = vmatpush1.msra.mxu0 0.0
    %165 = vmatprep.subr.mxu0 0.0
    %166 = vmatpush1.msra.mxu0 0.0
    %167 = vmatprep.subr.mxu0 0.0
    %168 = vmatpush1.msra.mxu0 0.0
    %169 = vmatprep.subr.mxu0 0.0
    %170 = vmatpush1.msra.mxu0 0.0
    %171 = vmatprep.subr.mxu0 0.0
    %172 = vmatpush1.msra.mxu0 0.0
    %173 = vmatprep.subr.mxu0 0.0
    %174 = vmatpush1.msra.mxu0 0.0
    %175 = vmatprep.subr.mxu0 0.0
    %176 = vmatpush1.msra.mxu0 0.0
    %177 = vmatprep.subr.mxu0 0.0
    %178 = vmatpush1.msra.mxu0 0.0
    %179 = vmatprep.subr.mxu0 0.0
    %180 = vmatpush1.msra.mxu0 0.0
    %181 = vmatprep.subr.mxu0 0.0
    %182 = vmatpush1.msra.mxu0 0.0
    %183 = vmatprep.subr.mxu0 0.0
    %184 = vmatpush1.msra.mxu0 0.0
    %185 = vmatprep.subr.mxu0 0.0
    %186 = vmatpush1.msra.mxu0 0.0
    %187 = vmatprep.subr.mxu0 0.0
    %188 = vmatpush1.msra.mxu0 0.0
    %189 = vmatprep.subr.mxu0 0.0
    %190 = vmatpush1.msra.mxu0 0.0
    %191 = vmatprep.subr.mxu0 0.0
    %192 = vmatpush1.msra.mxu0 0.0
    %193 = vmatprep.subr.mxu0 0.0
    %194 = vmatpush1.msra.mxu0 0.0
    %195 = vmatprep.subr.mxu0 0.0
    %196 = vmatpush1.msra.mxu0 0.0
    %197 = vmatprep.subr.mxu0 0.0
    %198 = vmatpush1.msra.mxu0 0.0
    %199 = vmatprep.mubr.f32.mxu0 0.0
    %200 = vmatmul.mubr.f32.gmra.mrb[0].mxu0 %v130
    %v201 = vpop.f32.mrb[0].mxu0
    %v202 = vadd.f32 %v126, %v201
    %v203 = vpop.f32.mrb[0].mxu0
    %204 = vmatprep.mubr.f32.mxu0 0.0
    %205 = vmatmul.mubr.f32.gmra.mrb[0].mxu0 %v133
    %v206 = vpop.f32.mrb[0].mxu0
    %v207 = vadd.f32 %v126, %v206
    %v208 = vpop.f32.mrb[0].mxu0
    %209 = vdwg.mxu0
    %210 = vst [vmem:[#allocation9] sm:$0xff] %v202
    %211 = vst [vmem:[#allocation9 + $0x8] sm:$0xff] %v207
    // Predicated region
    $region38: #{tpu_custom_call.1} parent=1 // pred_check
      _
    $region39: #{tpu_custom_call.1} parent=1 // pred_check_branch
      %213 = sbr.rel (0) target = $region41
    $region40: #{tpu_custom_call.1} parent=1 // pred_region
      %s215 = ssub.s32 256, 256
      %216 = vsyncadd [#allocation5], %s215
      %s217 = sshll.u32 [#allocation9], 4
      %s218 = int_to_ptr.vmem [resolvable:$true] %s217
      %223 = dma.vmem_to_hbm [thread:$0]  %s218, 256, %s5, [#allocation5], 128, 128, 8
    $region41: #{tpu_custom_call.1} parent=1 // pred_fallthru
      _
    // Predicated region
    $region42: #{tpu_custom_call.1} parent=1 // pred_check
      _
    $region43: #{tpu_custom_call.1} parent=1 // pred_check_branch
      %225 = sbr.rel (0) target = $region45
    $region44: #{tpu_custom_call.1} parent=1 // pred_region
      %226 = dma.done [#allocation5], 256
    $region45: #{tpu_custom_call.1} parent=1 // pred_fallthru
      _
    %227 = vsyncpa [#allocation4], 1
    %228 = vsyncpa [#allocation7], 1
    %229 = vsyncpa [#allocation5], 1

</llo_original>
